<compile_context>
chip_gen: v6e
topology: v6e:2x2x1
jax: 0.10.0
libtpu: 0.0.40
codegen_flags: <defaults>
</compile_context>

<pallas_src>
import functools

import jax
import jax.numpy as jnp
from jax import lax
from jax.experimental import pallas as pl
from jax.experimental.pallas import tpu as pltpu

DEFAULT_CHARS = ".abcdefghijklmnopqrstuvwxyz"   # 27-char vocab (ends token + a-z)
VOCAB = len(DEFAULT_CHARS)

_NEG_BIG = -1e30      # bias value for padded logit lanes (exp -> 0 in softmax)


def _round_up(x, m):
    return (x + m - 1) // m * m


def _onehot_matmul_softmax_kernel(ids_ref, w_ref, b_ref, out_ref):
    """One batch tile: out = softmax(one_hot(ids) @ W_eff + b_eff) over padded lanes.

    ids_ref : VMEM (tb, 1)  int32  token indices for this batch tile
    w_ref   : VMEM (vr, vp) f32/bf16  folded effective weight (resident)
    b_ref   : VMEM (1,  vp) f32    folded effective bias (-1e30 on padded lanes)
    out_ref : VMEM (tb, vp) f32/bf16  lane-dense output tile, written once
    """
    tb = out_ref.shape[0]
    vr = w_ref.shape[0]

    ids = ids_ref[...]                                         # (tb, 1) int32
    # Vectorized one-hot: cheap VPU compares, no serial gather loop.
    onehot = (lax.broadcasted_iota(jnp.int32, (tb, vr), 1) == ids)
    onehot = onehot.astype(w_ref.dtype)                        # (tb, vr)

    # Row "gather" as a tiny MXU matmul, accumulated in f32.
    h = jnp.dot(onehot, w_ref[...], preferred_element_type=jnp.float32)
    h = h + b_ref[...]                                         # (tb, vp) f32

    m = jnp.max(h, axis=-1, keepdims=True)
    e = jnp.exp(h - m)                                         # padded lanes -> 0
    denom = jnp.sum(e, axis=-1, keepdims=True)
    out_ref[...] = (e * pl.reciprocal(denom, approx=True)).astype(out_ref.dtype)


def fold_params(params):
    """Fold the (linear-only) layer chain into a single affine map in plain JAX."""
    w_eff, b_eff = None, None
    for w, b in params:
        w = w.astype(jnp.float32)
        if b is None:
            b = jnp.zeros((w.shape[1],), jnp.float32)
        else:
            b = b.astype(jnp.float32)
        if w_eff is None:
            w_eff, b_eff = w, b
        else:
            w_eff = w_eff @ w
            b_eff = b_eff @ w + b
    return w_eff, b_eff


def bigram_nnet_forward(x_idx, params, *, batch_tile=2048,
                        out_dtype=jnp.float32, matmul_dtype=jnp.float32):
    """x_idx: (B,) integer indices. params: list of (W, b) pairs (b may be None).

    out_dtype=jnp.bfloat16 halves output-writeback bytes (the kernel is
    write-bound after the gather fix); matmul_dtype=jnp.bfloat16 uses the
    native bf16 MXU on v6e/v7x.  Defaults stay f32 for exactness.
    """
    w_eff, b_eff = fold_params(params)
    v_in, v_out = w_eff.shape

    # Lane-dense padding: both the contraction dim (one-hot lanes) and the
    # output dim go to multiples of 128.  Padded weight rows/cols are zero;
    # padded bias lanes are -1e30 so softmax assigns them zero probability.
    vr = _round_up(v_in, 128)
    vp = _round_up(v_out, 128)
    w_pad = (jnp.zeros((vr, vp), matmul_dtype)
             .at[:v_in, :v_out].set(w_eff.astype(matmul_dtype)))
    b_pad = jnp.full((1, vp), _NEG_BIG, jnp.float32).at[0, :v_out].set(b_eff)

    b_sz = x_idx.shape[0]
    tb = min(batch_tile, _round_up(b_sz, 8))
    # v7x has 2 TensorCores: if the grid would be a single step and the tile
    # is splittable, halve it so the "parallel" axis actually feeds both TCs.
    if _round_up(b_sz, tb) // tb < 2 and tb >= 16:
        tb = _round_up(tb // 2, 8)
    bp = _round_up(b_sz, tb)

    # Clamp defends against out-of-range tokens (no runtime bounds check in VMEM).
    ids = jnp.clip(x_idx.astype(jnp.int32), 0, v_in - 1)
    ids = jnp.zeros((bp, 1), jnp.int32).at[:b_sz, 0].set(ids)

    out_padded = pl.pallas_call(
        _onehot_matmul_softmax_kernel,
        out_shape=jax.ShapeDtypeStruct((bp, vp), out_dtype),
        grid_spec=pltpu.PrefetchScalarGridSpec(
            num_scalar_prefetch=0,
            grid=(bp // tb,),
            in_specs=[
                pl.BlockSpec((tb, 1), lambda i: (i, 0)),    # ids per batch tile
                pl.BlockSpec((vr, vp), lambda i: (0, 0)),   # W_eff resident
                pl.BlockSpec((1, vp), lambda i: (0, 0)),    # b_eff resident
            ],
            out_specs=pl.BlockSpec((tb, vp), lambda i: (i, 0)),
        ),
        compiler_params=pltpu.CompilerParams(
            # batch tiles are independent -> shard across TCs (v7x megacore)
            dimension_semantics=("parallel",)),
    )(ids, w_pad, b_pad)

    return out_padded[:b_sz, :v_out]


def init_params(layer_sizes, key):
    """Deterministic standard-normal init (mirrors torch.randn in __init__)."""
    params = []
    for i in range(len(layer_sizes) - 1):
        key, kw, kb = jax.random.split(key, 3)
        w = jax.random.normal(kw, (layer_sizes[i], layer_sizes[i + 1]),
                              dtype=jnp.float32)
        b = jax.random.normal(kb, (layer_sizes[i + 1],), dtype=jnp.float32)
        params.append((w, b))
    return params


def reference_forward(x_idx, params):
    """Pure-JAX reference matching the PyTorch forward (unfolded layer chain)."""
    h = jax.nn.one_hot(x_idx, params[0][0].shape[0], dtype=jnp.float32)
    for w, b in params:
        h = h @ w
        if b is not None:
            h = h + b
    return jax.nn.softmax(h, axis=1)


# TODO(synk): loss/train/update_weights/generate are host-side training loops,
# out of scope for the forward-pass kernel.

if __name__ == "__main__":
    key = jax.random.PRNGKey(0)
    key_params, key_x = jax.random.split(key)

    # Bigram net: first and last layer sizes must equal len(DEFAULT_CHARS).
    layer_sizes = [VOCAB, 32, VOCAB]
    params = init_params(layer_sizes, key_params)

    batch = 8
    x_idx = jax.random.randint(key_x, (batch,), 0, VOCAB, dtype=jnp.int32)

    probs = bigram_nnet_forward(x_idx, params)
    probs = jax.block_until_ready(probs)

    ref = reference_forward(x_idx, params)
    assert probs.shape == (batch, VOCAB)
    # Tolerances cover the folded-weight reassociation and approx reciprocal.
    assert jnp.allclose(probs, ref, atol=1e-3, rtol=1e-2), "mismatch vs reference"
    assert jnp.allclose(jnp.sum(probs, axis=1), 1.0, atol=1e-2)

    print("KERNEL_OK")
</pallas_src>

<mosaic_0001>
module attributes {stable_mosaic.version = 11 : i64} {
  func.func @_onehot_matmul_softmax_kernel(%arg0: i32, %arg1: memref<8x1xi32, #tpu.memory_space<vmem>>, %arg2: memref<128x128xf32, #tpu.memory_space<vmem>>, %arg3: memref<1x128xf32, #tpu.memory_space<vmem>>, %arg4: memref<8x128xf32, #tpu.memory_space<vmem>>) attributes {dimension_semantics = [#tpu.dimension_semantics<parallel>], iteration_bounds = array<i64: 1>, scalar_prefetch = 0 : i64, scratch_operands = 0 : i64, tpu.core_type = #tpu.core_type<tc>, window_params = [{transform_indices = @transform_0, window_bounds = array<i64: 8, 1>}, {pipeline_mode = #tpu.pipeline_mode<synchronous>, transform_indices = @transform_1, window_bounds = array<i64: 128, 128>}, {pipeline_mode = #tpu.pipeline_mode<synchronous>, transform_indices = @transform_2, window_bounds = array<i64: 1, 128>}, {transform_indices = @transform_3, window_bounds = array<i64: 8, 128>}]} {
    %c0 = arith.constant 0 : index
    %c0_0 = arith.constant 0 : index
    %0 = vector.load %arg1[%c0, %c0_0] : memref<8x1xi32, #tpu.memory_space<vmem>>, vector<8x1xi32>
    %1 = tpu.iota {dimensions = array<i32: 1>} : vector<8x128xi32>
    %2 = vector.broadcast %0 : vector<8x1xi32> to vector<8x128xi32>
    %3 = arith.cmpi eq, %1, %2 : vector<8x128xi32>
    %4 = arith.extui %3 : vector<8x128xi1> to vector<8x128xi32>
    %5 = arith.sitofp %4 : vector<8x128xi32> to vector<8x128xf32>
    %c0_1 = arith.constant 0 : index
    %c0_2 = arith.constant 0 : index
    %6 = vector.load %arg2[%c0_1, %c0_2] : memref<128x128xf32, #tpu.memory_space<vmem>>, vector<128x128xf32>
    %cst = arith.constant dense<0.000000e+00> : vector<8x128xf32>
    %7 = tpu.matmul %5, %6, %cst {dimension_numbers = #tpu.dot_dimension_numbers<[1], [0], [0], [1], [0, 0, 1, 1], [], []>} : vector<8x128xf32>, vector<128x128xf32>, vector<8x128xf32> -> vector<8x128xf32>
    %c0_3 = arith.constant 0 : index
    %c0_4 = arith.constant 0 : index
    %8 = vector.load %arg3[%c0_3, %c0_4] : memref<1x128xf32, #tpu.memory_space<vmem>>, vector<1x128xf32>
    %9 = vector.broadcast %8 : vector<1x128xf32> to vector<8x128xf32>
    %10 = arith.addf %7, %9 : vector<8x128xf32>
    %cst_5 = arith.constant dense<0xFF800000> : vector<8xf32>
    %11 = vector.multi_reduction <maximumf>, %10, %cst_5 [1] : vector<8x128xf32> to vector<8xf32>
    %12 = vector.shape_cast %11 : vector<8xf32> to vector<8x1xf32>
    %13 = vector.broadcast %12 : vector<8x1xf32> to vector<8x128xf32>
    %14 = arith.subf %10, %13 : vector<8x128xf32>
    %15 = math.exp %14 : vector<8x128xf32>
    %cst_6 = arith.constant dense<0.000000e+00> : vector<8xf32>
    %16 = vector.multi_reduction <add>, %15, %cst_6 [1] : vector<8x128xf32> to vector<8xf32>
    %17 = vector.shape_cast %16 : vector<8xf32> to vector<8x1xf32>
    %18 = tpu.reciprocal %17 {approx = true} : vector<8x1xf32> -> vector<8x1xf32>
    %19 = vector.broadcast %18 : vector<8x1xf32> to vector<8x128xf32>
    %20 = arith.mulf %15, %19 : vector<8x128xf32>
    %c0_7 = arith.constant 0 : index
    %c0_8 = arith.constant 0 : index
    %21 = vector.load %arg4[%c0_7, %c0_8] : memref<8x128xf32, #tpu.memory_space<vmem>>, vector<8x128xf32>
    tpu.vector_store %arg4[%c0_7, %c0_8], %20 {strides = array<i32>} : memref<8x128xf32, #tpu.memory_space<vmem>>, vector<8x128xf32>,
    return
  }
  func.func @transform_0(%arg0: i32) -> (i32, i32) {
    %c0_i32 = arith.constant 0 : i32
    %c0_i32_0 = arith.constant 0 : i32
    return %arg0, %c0_i32 : i32, i32
  }
  func.func @transform_1(%arg0: i32) -> (i32, i32) {
    %c0_i32 = arith.constant 0 : i32
    %c0_i32_0 = arith.constant 0 : i32
    %c0_i32_1 = arith.constant 0 : i32
    return %c0_i32, %c0_i32_0 : i32, i32
  }
  func.func @transform_2(%arg0: i32) -> (i32, i32) {
    %c0_i32 = arith.constant 0 : i32
    %c0_i32_0 = arith.constant 0 : i32
    %c0_i32_1 = arith.constant 0 : i32
    return %c0_i32, %c0_i32_0 : i32, i32
  }
  func.func @transform_3(%arg0: i32) -> (i32, i32) {
    %c0_i32 = arith.constant 0 : i32
    %c0_i32_0 = arith.constant 0 : i32
    return %arg0, %c0_i32 : i32, i32
  }
}

</mosaic_0001>

<llo_original>
// kernel: tpu_custom_call.1
$region0: #{tpu_custom_call.1}
  #allocation0 [shape = 'u32[]', space=smem, size = 0x4, offset = 0x4, fixed_abs, tag = 'smem constant byte address 0x4 - core index']
  #allocation1 [shape = 'u32[144,128]{1,0:T(1,128)}', space=vmem, size = 0x12000, scoped, tag = 'internal scratch']
  %s0 = inlined_call_operand.vmem [shape: s32[8,1], index: 0, kind: input, shape index: {}]
  %s1 = inlined_call_operand.hbm [shape: f32[128,128], index: 1, kind: input, shape index: {}]
  %s2 = inlined_call_operand.vmem [shape: f32[1,128], index: 2, kind: input, shape index: {}]
  %s3 = inlined_call_operand.hbm [shape: f32[8,128], index: 3, kind: output, shape index: {}]
  %s4 = sld [smem:[#allocation0]]
  $region26: #{tpu_custom_call.1} parent=0
    _
  %s6 = ssub.s32 1, %s4
  %s7 = scalar_select 0, %s6, %s4
  $region1: #{tpu_custom_call.1} parent=0
    #allocation2 [shape = 'u8[65536]{0}', space=vmem, size = 0x10000, scoped, tag = 'input window, operand 1, single buffered']
    #allocation3 [shape = 's32[1]{0}', space=sflag, size = 0x4, scoped, tag = 'scoped memory for tpu_custom_call.1']
    #allocation4 [shape = 's32[1]{0}', space=sflag, size = 0x4, scoped, tag = 'scoped memory for tpu_custom_call.1']
    #allocation5 [shape = 'u8[4096]{0}', space=vmem, size = 0x1000, scoped, tag = 'output window, operand 0, single buffered']
    %8 = vsyncpa [#allocation3], 0
    %9 = vsyncpa [#allocation4], 0
    // Predicated region
    $region2: #{tpu_custom_call.1} parent=1 // pred_check
      _
    $region3: #{tpu_custom_call.1} parent=1 // pred_check_branch
      %11 = sbr.rel (0) target = $region5
    $region4: #{tpu_custom_call.1} parent=1 // pred_region
      _
    $region5: #{tpu_custom_call.1} parent=1 // pred_fallthru
      _
    // Predicated region
    $region6: #{tpu_custom_call.1} parent=1 // pred_check
      _
    $region7: #{tpu_custom_call.1} parent=1 // pred_check_branch
      %13 = sbr.rel (0) target = $region9
    $region8: #{tpu_custom_call.1} parent=1 // pred_region
      %s15 = ssub.s32 2048, 2048
      %16 = vsyncadd [#allocation3], %s15
      %s17 = sshll.u32 [#allocation2], 4
      %s18 = int_to_ptr.vmem [resolvable:$true] %s17
      %23 = dma.hbm_to_vmem [thread:$0]  %s1, 2048, %s18, [#allocation3], 128, 128, 8
    $region9: #{tpu_custom_call.1} parent=1 // pred_fallthru
      _
    // Predicated region
    $region10: #{tpu_custom_call.1} parent=1 // pred_check
      _
    $region11: #{tpu_custom_call.1} parent=1 // pred_check_branch
      %25 = sbr.rel (0) target = $region13
    $region12: #{tpu_custom_call.1} parent=1 // pred_region
      _
    $region13: #{tpu_custom_call.1} parent=1 // pred_fallthru
      _
    // Predicated region
    $region14: #{tpu_custom_call.1} parent=1 // pred_check
      _
    $region15: #{tpu_custom_call.1} parent=1 // pred_check_branch
      %27 = sbr.rel (0) target = $region17
    $region16: #{tpu_custom_call.1} parent=1 // pred_region
      %28 = dma.done [#allocation3], 2048
    $region17: #{tpu_custom_call.1} parent=1 // pred_fallthru
      _
    %v29 = vld [vmem:[%s0] sm:$0xff]
    %v30 = vlaneseq
    %v31 = vand.u32 %v30, 127
    %32 = vset.pattern.permute.xlu0 0
    %33 = vperm.xlu0 %32, %v29
    %v34 = vpop.permute.xlu0 %33
    %vm35 = vcmp.eq.s32.totalorder %v31, %v34
    %v36 = vsel %vm35, 1, 0
    %v37 = vcvt.s32.f32 %v36
    %v38 = vld [vmem:[#allocation2] sm:$0xff]
    %v39 = vld [vmem:[#allocation2 + $0x8] sm:$0xff]
    %v40 = vld [vmem:[#allocation2 + $0x10] sm:$0xff]
    %v41 = vld [vmem:[#allocation2 + $0x18] sm:$0xff]
    %v42 = vld [vmem:[#allocation2 + $0x20] sm:$0xff]
    %v43 = vld [vmem:[#allocation2 + $0x28] sm:$0xff]
    %v44 = vld [vmem:[#allocation2 + $0x30] sm:$0xff]
    %v45 = vld [vmem:[#allocation2 + $0x38] sm:$0xff]
    %v46 = vld [vmem:[#allocation2 + $0x40] sm:$0xff]
    %v47 = vld [vmem:[#allocation2 + $0x48] sm:$0xff]
    %v48 = vld [vmem:[#allocation2 + $0x50] sm:$0xff]
    %v49 = vld [vmem:[#allocation2 + $0x58] sm:$0xff]
    %v50 = vld [vmem:[#allocation2 + $0x60] sm:$0xff]
    %v51 = vld [vmem:[#allocation2 + $0x68] sm:$0xff]
    %v52 = vld [vmem:[#allocation2 + $0x70] sm:$0xff]
    %v53 = vld [vmem:[#allocation2 + $0x78] sm:$0xff]
    %v54 = vld [vmem:[%s2] sm:$0x1]
    %v56 = vlaneseq
    %v57 = vshrl.u32 %v56, 7
    %v58 = vsub.s32 0, %v57
    %v59 = vrot.slane %v54, %v58
    %61 = vmatprep.subr.mxu0 0.0
    %62 = vmatpush1.msra.mxu0 %v53
    %63 = vmatprep.subr.mxu0 0.0
    %64 = vmatpush1.msra.mxu0 %v52
    %65 = vmatprep.subr.mxu0 0.0
    %66 = vmatpush1.msra.mxu0 %v51
    %67 = vmatprep.subr.mxu0 0.0
    %68 = vmatpush1.msra.mxu0 %v50
    %69 = vmatprep.subr.mxu0 0.0
    %70 = vmatpush1.msra.mxu0 %v49
    %71 = vmatprep.subr.mxu0 0.0
    %72 = vmatpush1.msra.mxu0 %v48
    %73 = vmatprep.subr.mxu0 0.0
    %74 = vmatpush1.msra.mxu0 %v47
    %75 = vmatprep.subr.mxu0 0.0
    %76 = vmatpush1.msra.mxu0 %v46
    %77 = vmatprep.subr.mxu0 0.0
    %78 = vmatpush1.msra.mxu0 %v45
    %79 = vmatprep.subr.mxu0 0.0
    %80 = vmatpush1.msra.mxu0 %v44
    %81 = vmatprep.subr.mxu0 0.0
    %82 = vmatpush1.msra.mxu0 %v43
    %83 = vmatprep.subr.mxu0 0.0
    %84 = vmatpush1.msra.mxu0 %v42
    %85 = vmatprep.subr.mxu0 0.0
    %86 = vmatpush1.msra.mxu0 %v41
    %87 = vmatprep.subr.mxu0 0.0
    %88 = vmatpush1.msra.mxu0 %v40
    %89 = vmatprep.subr.mxu0 0.0
    %90 = vmatpush1.msra.mxu0 %v39
    %91 = vmatprep.subr.mxu0 0.0
    %92 = vmatpush1.msra.mxu0 %v38
    %93 = vmatprep.subr.mxu0 0.0
    %94 = vmatpush2.msra.mxu0 0.0
    %95 = vmatprep.subr.mxu0 0.0
    %96 = vmatpush2.msra.mxu0 0.0
    %97 = vmatprep.subr.mxu0 0.0
    %98 = vmatpush2.msra.mxu0 0.0
    %99 = vmatprep.subr.mxu0 0.0
    %100 = vmatpush2.msra.mxu0 0.0
    %101 = vmatprep.subr.mxu0 0.0
    %102 = vmatpush2.msra.mxu0 0.0
    %103 = vmatprep.subr.mxu0 0.0
    %104 = vmatpush2.msra.mxu0 0.0
    %105 = vmatprep.subr.mxu0 0.0
    %106 = vmatpush2.msra.mxu0 0.0
    %107 = vmatprep.subr.mxu0 0.0
    %108 = vmatpush2.msra.mxu0 0.0
    %109 = vmatprep.subr.mxu0 0.0
    %110 = vmatpush2.msra.mxu0 0.0
    %111 = vmatprep.subr.mxu0 0.0
    %112 = vmatpush2.msra.mxu0 0.0
    %113 = vmatprep.subr.mxu0 0.0
    %114 = vmatpush2.msra.mxu0 0.0
    %115 = vmatprep.subr.mxu0 0.0
    %116 = vmatpush2.msra.mxu0 0.0
    %117 = vmatprep.subr.mxu0 0.0
    %118 = vmatpush2.msra.mxu0 0.0
    %119 = vmatprep.subr.mxu0 0.0
    %120 = vmatpush2.msra.mxu0 0.0
    %121 = vmatprep.subr.mxu0 0.0
    %122 = vmatpush2.msra.mxu0 0.0
    %123 = vmatprep.subr.mxu0 0.0
    %124 = vmatpush2.msra.mxu0 0.0
    %125 = vmatprep.mubr.f32.mxu0 0.0
    %126 = vmatmul.mubr.f32.gmra.mxu0 %v37
    %v127 = vpop.f32.mrf.mxu0
    %v128 = vadd.f32 %v59, %v127
    %v129 = vpop.f32.mrf.mxu0
    %130 = vdwg.mxu0
    %131 = vmax.xlane.f32.xlu0 %v128
    %v132 = vpop.xlane.xlu0 %131
    %v133 = vsub.f32 %v128, %v132
    %v134 = vmul.f32 %v133, 1.442695
    %v135 = vpow.pop %v134
    %136 = vadd.xlane.f32.xlu0 %v135
    %v137 = vpop.xlane.xlu0 %136
    %v138 = vrcp.pop %v137
    %v139 = vmul.f32 %v135, %v138
    %140 = vst [vmem:[#allocation5] sm:$0xff] %v139
    // Predicated region
    $region18: #{tpu_custom_call.1} parent=1 // pred_check
      _
    $region19: #{tpu_custom_call.1} parent=1 // pred_check_branch
      %142 = sbr.rel (0) target = $region21
    $region20: #{tpu_custom_call.1} parent=1 // pred_region
      %s144 = ssub.s32 128, 128
      %145 = vsyncadd [#allocation4], %s144
      %s147 = sshll.u32 [#allocation5], 4
      %s148 = int_to_ptr.vmem [resolvable:$true] %s147
      %150 = dma.vmem_to_hbm [thread:$0]  %s148, 128, %s3, [#allocation4]
    $region21: #{tpu_custom_call.1} parent=1 // pred_fallthru
      _
    // Predicated region
    $region22: #{tpu_custom_call.1} parent=1 // pred_check
      _
    $region23: #{tpu_custom_call.1} parent=1 // pred_check_branch
      %152 = sbr.rel (0) target = $region25
    $region24: #{tpu_custom_call.1} parent=1 // pred_region
      %153 = dma.done [#allocation4], 128
    $region25: #{tpu_custom_call.1} parent=1 // pred_fallthru
      _
    %154 = vsyncpa [#allocation3], 1
    %155 = vsyncpa [#allocation4], 1

</llo_original>
